<compile_context>
chip_gen: v7x
topology: tpu7x:2x2x1
jax: 0.10.0
libtpu: 0.0.40
codegen_flags: <defaults>
</compile_context>

<pallas_src>
import jax
import jax.numpy as jnp
from jax.experimental import pallas as pl
from jax.experimental.pallas import tpu as pltpu


def _resdowns_kernel(x_ref, w_ref, shift_ref, o_ref):
    # x_ref:     (Bn, Cin, ts)  bf16 — channels on sublanes, spatial pixels on lanes
    # w_ref:     (Cout, Cin)    bf16 — 1x1 conv weight with BN scale folded in
    # shift_ref: (Cout, 1)      f32  — folded BN shift (beta - mean * scale)
    # o_ref:     (Bn, Cout, ts) f32
    w = w_ref[...]
    shift = shift_ref[...]
    for b in range(x_ref.shape[0]):          # Bn is small and static -> unrolled
        y = jnp.dot(w, x_ref[b], preferred_element_type=jnp.float32)
        o_ref[b] = (y + shift).astype(o_ref.dtype)


def _vmem_capacity_bytes():
    """Per-core VMEM capacity; conservative fallback if the query is unavailable."""
    try:
        info = pltpu.get_tpu_info()
        cap = getattr(info, "vmem_capacity_bytes", None)
        if cap:
            return int(cap)
    except Exception:
        pass
    return 64 << 20   # v7x per-TensorCore VMEM (smallest current target)


def _pick_spatial_tile(S, Cin, Cout, bn, n_batch_blocks, vmem_budget_bytes,
                       max_cols=8192):
    """Pick the spatial (lane) tile size.

    The budget covers double-buffered bf16 activation + f32 output tiles plus the
    (double-buffered) constant weight/shift operands.  The result is either the full
    spatial extent or a multiple of 128 (Pallas masks the partial last block).
    """
    per_col = 2 * bn * (Cin * 2 + Cout * 4)          # 2x buffered, bf16 in / f32 out
    const_bytes = 2 * (Cout * Cin * 2 + Cout * 4)    # weight (bf16) + shift (f32)
    cols = max(128, (vmem_budget_bytes - const_bytes) // per_col)
    cols = min(cols, max_cols)
    ts = S if cols >= S else max(128, (cols // 128) * 128)

    # Megacore (v7x has 2 TensorCores): expose >= 4 parallel grid steps for large maps
    # so a single-image call does not leave a core idle.  Never shrink the lane extent
    # below 128 columns (lane-dense unmasked stores are the biggest single lever).
    target_steps = 4
    if n_batch_blocks * pl.cdiv(S, ts) < target_steps:
        want_blocks = pl.cdiv(target_steps, n_batch_blocks)
        ts_split = max(128, pl.cdiv(pl.cdiv(S, want_blocks), 128) * 128)
        if ts_split < ts:
            ts = ts_split

    return min(ts, S)


def res_down_s(x, conv_w, gamma, beta, running_mean, running_var, eps=1e-5):
    """Forward of ResDownS (eval-mode BatchNorm folded into the 1x1 conv).

    x:       (N, Cin, H, W)   float32, NCHW
    conv_w:  (Cout, Cin, 1, 1)
    gamma/beta/running_mean/running_var: (Cout,)
    """
    N, Cin, H, W = x.shape
    Cout = conv_w.shape[0]

    # `if x.size(3) < 20: crop [4:-4, 4:-4]` — the 1x1 conv + per-channel BN are
    # pointwise, so cropping the INPUT first is exactly equivalent and skips 75% of
    # the compute and output writes.  (XLA materializes one small copy for the slice.)
    if W < 20:
        x = x[:, :, 4:-4, 4:-4]
        H, W = H - 8, W - 8

    S = H * W
    # Cast activations to bf16 for the MXU / HBM-traffic win; contiguous NCHW reshape.
    x3 = x.reshape(N, Cin, S).astype(jnp.bfloat16)

    # Fold eval-mode BatchNorm into the conv weight + per-channel shift.
    scale = gamma / jnp.sqrt(running_var + eps)                              # (Cout,)
    w_folded = (conv_w.reshape(Cout, Cin) * scale[:, None]).astype(jnp.bfloat16)
    shift = (beta - running_mean * scale).reshape(Cout, 1).astype(jnp.float32)

    # Batch-pack the small-S (crop / template) path so each grid step does enough work.
    bn = min(N, 8) if S < 512 else 1
    n_batch_blocks = pl.cdiv(N, bn)

    cap = _vmem_capacity_bytes()
    tile_budget = cap * 3 // 8                 # ~48 MiB on v5e/v6e, ~24 MiB on v7x
    vmem_limit = max(32 << 20, min(cap * 3 // 4, cap - (8 << 20)))
    ts = _pick_spatial_tile(S, Cin, Cout, bn, n_batch_blocks, tile_budget)

    grid = (n_batch_blocks, pl.cdiv(S, ts))

    flops = 2 * N * Cout * Cin * S
    bytes_accessed = (N * Cin * S * 2          # bf16 activations in
                      + N * Cout * S * 4       # f32 output
                      + Cout * Cin * 2         # bf16 folded weight
                      + Cout * 4)              # f32 shift

    out = pl.pallas_call(
        _resdowns_kernel,
        out_shape=jax.ShapeDtypeStruct((N, Cout, S), jnp.float32),
        grid_spec=pltpu.PrefetchScalarGridSpec(
            num_scalar_prefetch=0,
            grid=grid,
            in_specs=[
                pl.BlockSpec((bn, Cin, ts), lambda n, s: (n, 0, s)),    # activations
                pl.BlockSpec((Cout, Cin), lambda n, s: (0, 0)),         # folded weight
                pl.BlockSpec((Cout, 1), lambda n, s: (0, 0)),           # folded shift
            ],
            out_specs=pl.BlockSpec((bn, Cout, ts), lambda n, s: (n, 0, s)),
        ),
        compiler_params=pltpu.CompilerParams(
            dimension_semantics=("parallel", "parallel"),
            vmem_limit_bytes=int(vmem_limit)),
        cost_estimate=pl.CostEstimate(
            flops=int(flops), transcendentals=0, bytes_accessed=int(bytes_accessed)),
    )(x3, w_folded, shift)

    return out.reshape(N, Cout, H, W)          # contiguous (N, Cout, S) -> NCHW view


def _reference(x, conv_w, gamma, beta, running_mean, running_var, eps=1e-5):
    # Pure-JAX f32 reference (1x1 conv + eval-mode BN + crop), matches the PyTorch module.
    N, Cin, H, W = x.shape
    Cout = conv_w.shape[0]
    y = jnp.einsum("nchw,oc->nohw", x, conv_w.reshape(Cout, Cin))
    scale = (gamma / jnp.sqrt(running_var + eps)).reshape(1, Cout, 1, 1)
    shift = (beta - running_mean * gamma / jnp.sqrt(running_var + eps)).reshape(1, Cout, 1, 1)
    y = y * scale + shift
    if W < 20:
        y = y[:, :, 4:-4, 4:-4]
    return y


if __name__ == "__main__":
    key = jax.random.PRNGKey(0)
    k_x, k_w, k_g, k_b, k_m, k_v = jax.random.split(key, 6)

    N, Cin, Cout, H, W = 2, 4, 8, 16, 16   # small synthetic shapes (W < 20 -> crop path)
    x = jax.random.normal(k_x, (N, Cin, H, W), dtype=jnp.float32)
    conv_w = jax.random.normal(k_w, (Cout, Cin, 1, 1), dtype=jnp.float32) * 0.1
    gamma = jax.random.normal(k_g, (Cout,), dtype=jnp.float32) * 0.1 + 1.0
    beta = jax.random.normal(k_b, (Cout,), dtype=jnp.float32) * 0.1
    running_mean = jax.random.normal(k_m, (Cout,), dtype=jnp.float32) * 0.1
    running_var = jax.nn.softplus(jax.random.normal(k_v, (Cout,), dtype=jnp.float32)) + 0.5

    y = res_down_s(x, conv_w, gamma, beta, running_mean, running_var)
    y = jax.block_until_ready(y)

    y_ref = _reference(x, conv_w, gamma, beta, running_mean, running_var)
    assert y.shape == (N, Cout, H - 8, W - 8), y.shape
    # bf16 inputs/weights with f32 accumulation -> small drift vs the f32 reference.
    assert jnp.allclose(y, y_ref, atol=2e-2, rtol=2e-2), float(jnp.max(jnp.abs(y - y_ref)))

    print("KERNEL_OK")
</pallas_src>

<mosaic_0001>
module attributes {stable_mosaic.version = 11 : i64} {
  func.func @_resdowns_kernel(%arg0: i32, %arg1: i32, %arg2: memref<2x4x64xbf16, #tpu.memory_space<vmem>>, %arg3: memref<8x4xbf16, #tpu.memory_space<vmem>>, %arg4: memref<8x1xf32, #tpu.memory_space<vmem>>, %arg5: memref<2x8x64xf32, #tpu.memory_space<vmem>>) attributes {dimension_semantics = [#tpu.dimension_semantics<parallel>, #tpu.dimension_semantics<parallel>], iteration_bounds = array<i64: 1, 1>, scalar_prefetch = 0 : i64, scratch_operands = 0 : i64, tpu.core_type = #tpu.core_type<tc>, window_params = [{transform_indices = @transform_0, window_bounds = array<i64: 2, 4, 64>}, {pipeline_mode = #tpu.pipeline_mode<synchronous>, transform_indices = @transform_1, window_bounds = array<i64: 8, 4>}, {pipeline_mode = #tpu.pipeline_mode<synchronous>, transform_indices = @transform_2, window_bounds = array<i64: 8, 1>}, {transform_indices = @transform_3, window_bounds = array<i64: 2, 8, 64>}]} {
    %c0 = arith.constant 0 : index
    %c0_0 = arith.constant 0 : index
    %0 = vector.load %arg3[%c0, %c0_0] : memref<8x4xbf16, #tpu.memory_space<vmem>>, vector<8x4xbf16>
    %c0_1 = arith.constant 0 : index
    %c0_2 = arith.constant 0 : index
    %1 = vector.load %arg4[%c0_1, %c0_2] : memref<8x1xf32, #tpu.memory_space<vmem>>, vector<8x1xf32>
    %c0_3 = arith.constant 0 : index
    %c0_4 = arith.constant 0 : index
    %c0_5 = arith.constant 0 : index
    %2 = vector.load %arg2[%c0_3, %c0_4, %c0_5] : memref<2x4x64xbf16, #tpu.memory_space<vmem>>, vector<1x4x64xbf16>
    %3 = vector.shape_cast %2 : vector<1x4x64xbf16> to vector<4x64xbf16>
    %cst = arith.constant dense<0.000000e+00> : vector<8x64xf32>
    %4 = tpu.matmul %0, %3, %cst {dimension_numbers = #tpu.dot_dimension_numbers<[1], [0], [0], [1], [0, 0, 1, 1], [], []>} : vector<8x4xbf16>, vector<4x64xbf16>, vector<8x64xf32> -> vector<8x64xf32>
    %5 = vector.broadcast %1 : vector<8x1xf32> to vector<8x64xf32>
    %6 = arith.addf %4, %5 : vector<8x64xf32>
    %c0_6 = arith.constant 0 : index
    %c0_7 = arith.constant 0 : index
    %c0_8 = arith.constant 0 : index
    %7 = vector.load %arg5[%c0_6, %c0_7, %c0_8] : memref<2x8x64xf32, #tpu.memory_space<vmem>>, vector<1x8x64xf32>
    %8 = vector.shape_cast %7 : vector<1x8x64xf32> to vector<8x64xf32>
    %9 = vector.shape_cast %6 : vector<8x64xf32> to vector<1x8x64xf32>
    tpu.vector_store %arg5[%c0_6, %c0_7, %c0_8], %9 {strides = array<i32>} : memref<2x8x64xf32, #tpu.memory_space<vmem>>, vector<1x8x64xf32>,
    %c1 = arith.constant 1 : index
    %c0_9 = arith.constant 0 : index
    %c0_10 = arith.constant 0 : index
    %10 = vector.load %arg2[%c1, %c0_9, %c0_10] : memref<2x4x64xbf16, #tpu.memory_space<vmem>>, vector<1x4x64xbf16>
    %11 = vector.shape_cast %10 : vector<1x4x64xbf16> to vector<4x64xbf16>
    %cst_11 = arith.constant dense<0.000000e+00> : vector<8x64xf32>
    %12 = tpu.matmul %0, %11, %cst_11 {dimension_numbers = #tpu.dot_dimension_numbers<[1], [0], [0], [1], [0, 0, 1, 1], [], []>} : vector<8x4xbf16>, vector<4x64xbf16>, vector<8x64xf32> -> vector<8x64xf32>
    %13 = vector.broadcast %1 : vector<8x1xf32> to vector<8x64xf32>
    %14 = arith.addf %12, %13 : vector<8x64xf32>
    %c1_12 = arith.constant 1 : index
    %c0_13 = arith.constant 0 : index
    %c0_14 = arith.constant 0 : index
    %15 = vector.load %arg5[%c1_12, %c0_13, %c0_14] : memref<2x8x64xf32, #tpu.memory_space<vmem>>, vector<1x8x64xf32>
    %16 = vector.shape_cast %15 : vector<1x8x64xf32> to vector<8x64xf32>
    %17 = vector.shape_cast %14 : vector<8x64xf32> to vector<1x8x64xf32>
    tpu.vector_store %arg5[%c1_12, %c0_13, %c0_14], %17 {strides = array<i32>} : memref<2x8x64xf32, #tpu.memory_space<vmem>>, vector<1x8x64xf32>,
    return
  }
  func.func @transform_0(%arg0: i32, %arg1: i32) -> (i32, i32, i32) {
    %c0_i32 = arith.constant 0 : i32
    %c0_i32_0 = arith.constant 0 : i32
    return %arg0, %c0_i32, %arg1 : i32, i32, i32
  }
  func.func @transform_1(%arg0: i32, %arg1: i32) -> (i32, i32) {
    %c0_i32 = arith.constant 0 : i32
    %c0_i32_0 = arith.constant 0 : i32
    %c0_i32_1 = arith.constant 0 : i32
    return %c0_i32, %c0_i32_0 : i32, i32
  }
  func.func @transform_2(%arg0: i32, %arg1: i32) -> (i32, i32) {
    %c0_i32 = arith.constant 0 : i32
    %c0_i32_0 = arith.constant 0 : i32
    %c0_i32_1 = arith.constant 0 : i32
    return %c0_i32, %c0_i32_0 : i32, i32
  }
  func.func @transform_3(%arg0: i32, %arg1: i32) -> (i32, i32, i32) {
    %c0_i32 = arith.constant 0 : i32
    %c0_i32_0 = arith.constant 0 : i32
    return %arg0, %c0_i32, %arg1 : i32, i32, i32
  }
}

</mosaic_0001>

<llo_original>
// kernel: tpu_custom_call.1
$region0: #{tpu_custom_call.1}
  #allocation0 [shape = 'u32[]', space=smem, size = 0x4, offset = 0x4, fixed_abs, tag = 'smem constant byte address 0x4 - core index']
  #allocation1 [shape = 'u32[144,128]{1,0:T(1,128)}', space=vmem, size = 0x12000, scoped, tag = 'internal scratch']
  %s0 = inlined_call_operand.vmem [shape: bf16[2,4,64], index: 0, kind: input, shape index: {}]
  %s1 = inlined_call_operand.vmem [shape: bf16[8,4], index: 1, kind: input, shape index: {}]
  %s2 = inlined_call_operand.vmem [shape: f32[8,1], index: 2, kind: input, shape index: {}]
  %s3 = inlined_call_operand.hbm [shape: f32[2,8,64], index: 3, kind: output, shape index: {}]
  %s4 = sld [smem:[#allocation0]]
  $region22: #{tpu_custom_call.1} parent=0
    _
  %s6 = ssub.s32 1, %s4
  %s7 = scalar_select 0, %s6, %s4
  $region1: #{tpu_custom_call.1} parent=0
    #allocation2 [shape = 'u8[8192]{0}', space=vmem, size = 0x2000, scoped, tag = 'output window, operand 0, single buffered']
    #allocation3 [shape = 's32[1]{0}', space=sflag, size = 0x4, scoped, tag = 'scoped memory for tpu_custom_call.1']
    %8 = vsyncpa [#allocation3], 0
    // Predicated region
    $region2: #{tpu_custom_call.1} parent=1 // pred_check
      _
    $region3: #{tpu_custom_call.1} parent=1 // pred_check_branch
      %10 = sbr.rel (0) target = $region5
    $region4: #{tpu_custom_call.1} parent=1 // pred_region
      _
    $region5: #{tpu_custom_call.1} parent=1 // pred_fallthru
      _
    // Predicated region
    $region6: #{tpu_custom_call.1} parent=1 // pred_check
      _
    $region7: #{tpu_custom_call.1} parent=1 // pred_check_branch
      %12 = sbr.rel (0) target = $region9
    $region8: #{tpu_custom_call.1} parent=1 // pred_region
      _
    $region9: #{tpu_custom_call.1} parent=1 // pred_fallthru
      _
    // Predicated region
    $region10: #{tpu_custom_call.1} parent=1 // pred_check
      _
    $region11: #{tpu_custom_call.1} parent=1 // pred_check_branch
      %14 = sbr.rel (0) target = $region13
    $region12: #{tpu_custom_call.1} parent=1 // pred_region
      _
    $region13: #{tpu_custom_call.1} parent=1 // pred_fallthru
      _
    %v16 = vld [vmem:[%s1] sm:$0xf]
    %v17 = vld [vmem:[%s2] sm:$0xff]
    %v18 = vld [vmem:[%s0] sm:$0x3]
    %20 = vset.pattern.permute.xlu0 0
    %21 = vperm.xlu0 %20, %v17
    %v22 = vpop.permute.xlu0 %21
    %vm24 = vcmask 31744
    %v26 = vsel %vm24, %v16, 0
    %vm28 = vcmask 1041408
    %v30 = vsel %vm28, %v18, 0
    %32 = vmatprep.subr.bf16.mxu0 0
    %33 = vmatpush1.bf16.msra.mxu0 %v30
    %34 = vmatprep.subr.bf16.mxu0 0
    %35 = vmatpush1.bf16.msra.mxu0 0
    %36 = vmatprep.subr.bf16.mxu0 0
    %37 = vmatpush1.bf16.msra.mxu0 0
    %38 = vmatprep.subr.bf16.mxu0 0
    %39 = vmatpush1.bf16.msra.mxu0 0
    %40 = vmatprep.subr.bf16.mxu0 0
    %41 = vmatpush1.bf16.msra.mxu0 0
    %42 = vmatprep.subr.bf16.mxu0 0
    %43 = vmatpush1.bf16.msra.mxu0 0
    %44 = vmatprep.subr.bf16.mxu0 0
    %45 = vmatpush1.bf16.msra.mxu0 0
    %46 = vmatprep.subr.bf16.mxu0 0
    %47 = vmatpush1.bf16.msra.mxu0 0
    %48 = vmatprep.subr.bf16.mxu0 0
    %49 = vmatpush1.bf16.msra.mxu0 0
    %50 = vmatprep.subr.bf16.mxu0 0
    %51 = vmatpush1.bf16.msra.mxu0 0
    %52 = vmatprep.subr.bf16.mxu0 0
    %53 = vmatpush1.bf16.msra.mxu0 0
    %54 = vmatprep.subr.bf16.mxu0 0
    %55 = vmatpush1.bf16.msra.mxu0 0
    %56 = vmatprep.subr.bf16.mxu0 0
    %57 = vmatpush1.bf16.msra.mxu0 0
    %58 = vmatprep.subr.bf16.mxu0 0
    %59 = vmatpush1.bf16.msra.mxu0 0
    %60 = vmatprep.subr.bf16.mxu0 0
    %61 = vmatpush1.bf16.msra.mxu0 0
    %62 = vmatprep.subr.bf16.mxu0 0
    %63 = vmatpush1.bf16.msra.mxu0 0
    %64 = vmatprep.mubr.bf16.mxu0 0
    %65 = vmatmul.mubr.bf16.gmra.mrb[0].mxu0 %v26
    %v66 = vpop.f32.mrb[0].mxu0
    %v67 = vadd.f32 %v22, %v66
    %v68 = vpop.f32.mrb[0].mxu0
    %v69 = vpop.f32.mrb[0].mxu0
    %v70 = vpop.f32.mrb[0].mxu0
    %71 = vdwg.mxu0
    %vm72 = vcmask 523264
    %73 = vst.msk [vmem:[#allocation2] sm:$0xff] %vm72, %v67
    %s74 = scalar_lea.vmem %s0, 2
    %v75 = vld [vmem:[%s74] sm:$0x3]
    %v77 = vsel %vm28, %v75, 0
    %79 = vmatprep.subr.bf16.mxu0 0
    %80 = vmatpush1.bf16.msra.mxu0 %v77
    %81 = vmatprep.subr.bf16.mxu0 0
    %82 = vmatpush1.bf16.msra.mxu0 0
    %83 = vmatprep.subr.bf16.mxu0 0
    %84 = vmatpush1.bf16.msra.mxu0 0
    %85 = vmatprep.subr.bf16.mxu0 0
    %86 = vmatpush1.bf16.msra.mxu0 0
    %87 = vmatprep.subr.bf16.mxu0 0
    %88 = vmatpush1.bf16.msra.mxu0 0
    %89 = vmatprep.subr.bf16.mxu0 0
    %90 = vmatpush1.bf16.msra.mxu0 0
    %91 = vmatprep.subr.bf16.mxu0 0
    %92 = vmatpush1.bf16.msra.mxu0 0
    %93 = vmatprep.subr.bf16.mxu0 0
    %94 = vmatpush1.bf16.msra.mxu0 0
    %95 = vmatprep.subr.bf16.mxu0 0
    %96 = vmatpush1.bf16.msra.mxu0 0
    %97 = vmatprep.subr.bf16.mxu0 0
    %98 = vmatpush1.bf16.msra.mxu0 0
    %99 = vmatprep.subr.bf16.mxu0 0
    %100 = vmatpush1.bf16.msra.mxu0 0
    %101 = vmatprep.subr.bf16.mxu0 0
    %102 = vmatpush1.bf16.msra.mxu0 0
    %103 = vmatprep.subr.bf16.mxu0 0
    %104 = vmatpush1.bf16.msra.mxu0 0
    %105 = vmatprep.subr.bf16.mxu0 0
    %106 = vmatpush1.bf16.msra.mxu0 0
    %107 = vmatprep.subr.bf16.mxu0 0
    %108 = vmatpush1.bf16.msra.mxu0 0
    %109 = vmatprep.subr.bf16.mxu0 0
    %110 = vmatpush1.bf16.msra.mxu0 0
    %111 = vmatprep.mubr.bf16.mxu0 0
    %112 = vmatmul.mubr.bf16.gmra.mrb[0].mxu0 %v26
    %v113 = vpop.f32.mrb[0].mxu0
    %v114 = vadd.f32 %v22, %v113
    %v115 = vpop.f32.mrb[0].mxu0
    %v116 = vpop.f32.mrb[0].mxu0
    %v117 = vpop.f32.mrb[0].mxu0
    %118 = vdwg.mxu0
    %s119 = scalar_lea.vmem [#allocation2], 8
    %120 = vst.msk [vmem:[%s119] sm:$0xff] %vm72, %v114
    // Predicated region
    $region14: #{tpu_custom_call.1} parent=1 // pred_check
      _
    $region15: #{tpu_custom_call.1} parent=1 // pred_check_branch
      %122 = sbr.rel (0) target = $region17
    $region16: #{tpu_custom_call.1} parent=1 // pred_region
      %s124 = ssub.s32 256, 256
      %125 = vsyncadd [#allocation3], %s124
      %s126 = sshll.u32 [#allocation2], 4
      %s127 = int_to_ptr.vmem [resolvable:$true] %s126
      %132 = dma.vmem_to_hbm [thread:$0]  %s127, 256, %s3, [#allocation3], 128, 128, 8
    $region17: #{tpu_custom_call.1} parent=1 // pred_fallthru
      _
    // Predicated region
    $region18: #{tpu_custom_call.1} parent=1 // pred_check
      _
    $region19: #{tpu_custom_call.1} parent=1 // pred_check_branch
      %134 = sbr.rel (0) target = $region21
    $region20: #{tpu_custom_call.1} parent=1 // pred_region
      %135 = dma.done [#allocation3], 256
    $region21: #{tpu_custom_call.1} parent=1 // pred_fallthru
      _
    %136 = vsyncpa [#allocation3], 1

</llo_original>
